<compile_context>
chip_gen: v7x
topology: tpu7x:2x2x1
jax: 0.10.0
libtpu: 0.0.40
codegen_flags: <defaults>
</compile_context>

<pallas_src>
import functools

import jax
import jax.numpy as jnp
from jax.experimental import pallas as pl
from jax.experimental.pallas import tpu as pltpu

_HIGHEST = jax.lax.Precision.HIGHEST


# ---------------------------------------------------------------------------
# Shared in-kernel math
# ---------------------------------------------------------------------------

def _sigmoid_exact(z):
    """Numerically-stable sigmoid (no overflow, no approx reciprocal).

    z is tiny ((TB, C) f32), so the exact divide costs nothing.
    """
    ez = jnp.exp(-jnp.abs(z))
    pos = 1.0 / (1.0 + ez)
    return jnp.where(z >= 0, pos, 1.0 - pos)


def _fused_mlp_sigmoid(max_pool, avg_pool, w1_ref, w2_ref):
    """Bias-free shared MLP on stacked pools, then exact sigmoid.

    max_pool/avg_pool: (TB, C) f32.  The two MLP passes are fused into one
    (2*TB, C) operand so the tiny matmuls pay the MXU fill/drain once.
    """
    n = max_pool.shape[0]
    pooled = jnp.concatenate([max_pool, avg_pool], axis=0)            # (2TB, C)
    h = jnp.maximum(
        jnp.dot(pooled, w1_ref[...], preferred_element_type=jnp.float32,
                precision=_HIGHEST), 0.0)
    logits2 = jnp.dot(h, w2_ref[...], preferred_element_type=jnp.float32,
                      precision=_HIGHEST)
    logits = logits2[:n, :] + logits2[n:, :]                          # (TB, C)
    return _sigmoid_exact(logits)


# ---------------------------------------------------------------------------
# Path 1: single-pass, (TB, C, HW) block resident per grid step
# ---------------------------------------------------------------------------

def _ca_resident_kernel(x_ref, w1_ref, w2_ref, o_ref):
    x = x_ref[...]                                          # (TB, C, HW) native
    # Reductions with f32 accumulation; no full f32 copy of the block.
    max_pool = jnp.max(x, axis=-1).astype(jnp.float32)                # (TB, C)
    avg_pool = jnp.sum(x, axis=-1, dtype=jnp.float32) * (1.0 / x_ref.shape[-1])
    scale = _fused_mlp_sigmoid(max_pool, avg_pool, w1_ref, w2_ref)    # (TB, C)
    # Re-read x for the multiply (reduce-then-reload keeps the live set to one
    # block + the (TB, C) scale; broadcast multiply stays in the native dtype).
    o_ref[...] = x_ref[...] * scale[:, :, None].astype(o_ref.dtype)


def _channel_attention_resident(xr, w1, w2, tb, vmem_limit):
    b, c, hw = xr.shape
    hid = w1.shape[1]
    return pl.pallas_call(
        _ca_resident_kernel,
        out_shape=jax.ShapeDtypeStruct((b, c, hw), xr.dtype),
        grid=(b // tb,),
        in_specs=[
            pl.BlockSpec((tb, c, hw), lambda i: (i, 0, 0)),
            pl.BlockSpec((c, hid), lambda i: (0, 0)),       # weights stay resident
            pl.BlockSpec((hid, c), lambda i: (0, 0)),
        ],
        out_specs=pl.BlockSpec((tb, c, hw), lambda i: (i, 0, 0)),
        compiler_params=pltpu.CompilerParams(
            dimension_semantics=("parallel",),               # megacore over batch
            vmem_limit_bytes=vmem_limit),
    )(xr, w1, w2)


# ---------------------------------------------------------------------------
# Path 2: two-phase (pool+MLP -> apply) for non-resident shapes
# ---------------------------------------------------------------------------

def _ca_pool_scale_kernel(x_ref, w1_ref, w2_ref, scale_ref, max_acc, sum_acc,
                          *, hw_total):
    # x_ref: (1, C, T).  max_acc/sum_acc: (1, C) f32 VMEM scratch.
    # scale_ref: (1, 1, C) f32 output, resident across the t axis; written only
    # at the last reduction step (after the fused MLP + sigmoid).
    t = pl.program_id(1)
    n_t = pl.num_programs(1)
    tile = x_ref.shape[-1]

    @pl.when(t == 0)
    def _():
        max_acc[...] = jnp.full(max_acc.shape, -jnp.inf, max_acc.dtype)
        sum_acc[...] = jnp.zeros(sum_acc.shape, sum_acc.dtype)

    x = x_ref[...]                                           # (1, C, T)

    def _accumulate(masked):
        if masked:
            lane = jax.lax.broadcasted_iota(jnp.int32, x.shape, dimension=2)
            valid = (t * tile + lane) < hw_total
            xm = jnp.where(valid, x, jnp.array(-jnp.inf, x.dtype))
            xs = jnp.where(valid, x, jnp.array(0, x.dtype))
        else:
            xm = x
            xs = x
        max_acc[...] = jnp.maximum(max_acc[...],
                                   jnp.max(xm, axis=-1).astype(jnp.float32))
        sum_acc[...] = sum_acc[...] + jnp.sum(xs, axis=-1, dtype=jnp.float32)

    if hw_total % tile != 0:
        # Only the final partial tile pays for the lane-validity mask.
        @pl.when(t == n_t - 1)
        def _():
            _accumulate(True)

        @pl.when(t != n_t - 1)
        def _():
            _accumulate(False)
    else:
        _accumulate(False)

    @pl.when(t == n_t - 1)
    def _():
        avg_pool = sum_acc[...] * (1.0 / hw_total)                    # (1, C)
        scale = _fused_mlp_sigmoid(max_acc[...], avg_pool, w1_ref, w2_ref)
        scale_ref[...] = scale[None]                                  # (1, 1, C)


def _ca_apply_kernel(scale_ref, x_ref, o_ref):
    # Pure streaming apply: no scratch, no pl.when -> both grid axes parallel.
    x = x_ref[...]                                           # (1, C, T)
    s = scale_ref[...][0].astype(x.dtype)                    # (1, C)
    o_ref[...] = x * s[:, :, None]


def _channel_attention_two_phase(xr, w1, w2, pool_tile, apply_tile, vmem_limit):
    b, c, hw = xr.shape
    hid = w1.shape[1]
    n_tp = pl.cdiv(hw, pool_tile)
    n_ta = pl.cdiv(hw, apply_tile)

    # Phase 1: masked max/sum reduction + fused MLP + sigmoid -> (B, 1, C).
    scale = pl.pallas_call(
        functools.partial(_ca_pool_scale_kernel, hw_total=hw),
        out_shape=jax.ShapeDtypeStruct((b, 1, c), jnp.float32),
        grid=(b, n_tp),
        in_specs=[
            pl.BlockSpec((1, c, pool_tile), lambda i, t: (i, 0, t)),
            pl.BlockSpec((c, hid), lambda i, t: (0, 0)),
            pl.BlockSpec((hid, c), lambda i, t: (0, 0)),
        ],
        out_specs=pl.BlockSpec((1, 1, c), lambda i, t: (i, 0, 0)),
        scratch_shapes=[pltpu.VMEM((1, c), jnp.float32),
                        pltpu.VMEM((1, c), jnp.float32)],
        compiler_params=pltpu.CompilerParams(
            dimension_semantics=("parallel", "arbitrary"),
            vmem_limit_bytes=vmem_limit),
    )(xr, w1, w2)
    # TODO(synk): for B == 1 on v7x, a leading parallel axis splitting HW into
    # per-core partial pools would recover the idle second TensorCore here.

    # Phase 2: lane-dense scale-and-store; both axes shardable across cores.
    return pl.pallas_call(
        _ca_apply_kernel,
        out_shape=jax.ShapeDtypeStruct((b, c, hw), xr.dtype),
        grid=(b, n_ta),
        in_specs=[
            pl.BlockSpec((1, 1, c), lambda i, t: (i, 0, 0)),
            pl.BlockSpec((1, c, apply_tile), lambda i, t: (i, 0, t)),
        ],
        out_specs=pl.BlockSpec((1, c, apply_tile), lambda i, t: (i, 0, t)),
        compiler_params=pltpu.CompilerParams(
            dimension_semantics=("parallel", "parallel"),
            vmem_limit_bytes=vmem_limit),
    )(scale, xr)


# ---------------------------------------------------------------------------
# Wrapper: VMEM-aware path / tile selection
# ---------------------------------------------------------------------------

def _vmem_limit_bytes():
    """Per-core VMEM limit: physical capacity minus ~16 MiB headroom.
    v5e/v6e (128 MiB) -> 112 MiB; v7x (64 MiB) -> 48 MiB."""
    cap = 64 << 20
    try:
        cap = int(pltpu.get_tpu_info().vmem_capacity_bytes)
    except Exception:
        pass
    return max(cap - (16 << 20), min(cap, 32 << 20))


def _pick_batch_tile(b, row_bytes, per_row_step, budget_bytes):
    """Fold batch rows per resident block: target >= ~2 MiB blocks (HBM
    roofline), keep >= 2 grid steps (v7x megacore), stay within budget."""
    best = 1
    for tb in range(1, b + 1):
        if b % tb:
            continue
        if tb * per_row_step > budget_bytes:
            break
        if b >= 2 and b // tb < 2:
            break
        best = tb
        if tb * row_bytes >= (2 << 20):
            break
    return best


def _pick_hw_tile(c, hw, itemsize, budget_bytes, n_buffers):
    """Largest 128-multiple spatial tile whose pipelined buffers fit budget."""
    if hw <= 128:
        return hw
    per_lane = n_buffers * c * itemsize
    tile = max((budget_bytes // per_lane) // 128 * 128, 128)
    return hw if tile >= hw else tile


def channel_attention(x, w1, w2, *, force_two_phase=False, hw_tile=None):
    """x: (B, C, H, W); w1: (C, C//r); w2: (C//r, C). Returns (B, C, H, W)."""
    b, c, h, w = x.shape
    hw = h * w
    xr = x.reshape(b, c, hw)
    itemsize = xr.dtype.itemsize

    vmem_limit = _vmem_limit_bytes()
    budget = max(vmem_limit - (6 << 20), 8 << 20)    # headroom: weights, scratch

    row_bytes = c * hw * itemsize
    # Resident per-row cost: in + out blocks double-buffered (4x native bytes)
    # plus an f32 accumulation working set when dtype is narrower than f32.
    per_row_step = 4 * row_bytes + (c * hw * 4 if itemsize < 4 else 0)

    if not force_two_phase and per_row_step <= budget:
        tb = _pick_batch_tile(b, row_bytes, per_row_step, budget)
        out = _channel_attention_resident(xr, w1, w2, tb, vmem_limit)
    else:
        if hw_tile is not None:
            t = min(hw_tile, hw)
            if t < hw:
                t = max(128, (t // 128) * 128)
            pool_tile = apply_tile = t
        else:
            # Pool pass only double-buffers its input; apply pass buffers in+out.
            pool_tile = _pick_hw_tile(c, hw, itemsize, budget, n_buffers=2)
            apply_tile = _pick_hw_tile(c, hw, itemsize, budget, n_buffers=4)
        out = _channel_attention_two_phase(xr, w1, w2, pool_tile, apply_tile,
                                           vmem_limit)
    return out.reshape(b, c, h, w)


# ---------------------------------------------------------------------------
# Pure-JAX reference mirroring the PyTorch forward
# ---------------------------------------------------------------------------

def channel_attention_ref(x, w1, w2):
    b, c, h, w = x.shape
    xf = x.reshape(b, c, h * w)
    max_pool = jnp.max(xf, axis=-1)
    avg_pool = jnp.mean(xf, axis=-1)

    def fc(v):
        h1 = jnp.maximum(jnp.dot(v, w1, precision=_HIGHEST), 0.0)
        return jnp.dot(h1, w2, precision=_HIGHEST)

    scale = jax.nn.sigmoid(fc(max_pool) + fc(avg_pool))
    return x * scale[:, :, None, None]


if __name__ == "__main__":
    # Channels must be divisible by ratio=16 (as in the PyTorch module).
    B, C, H, W = 2, 32, 16, 16
    ratio = 16
    hidden = C // ratio

    key = jax.random.PRNGKey(0)
    kx, k1, k2, kx2 = jax.random.split(key, 4)

    x = jax.random.normal(kx, (B, C, H, W), dtype=jnp.float32)
    w1 = jax.random.uniform(k1, (C, hidden), jnp.float32,
                            minval=-1.0, maxval=1.0) * (1.0 / jnp.sqrt(C))
    w2 = jax.random.uniform(k2, (hidden, C), jnp.float32,
                            minval=-1.0, maxval=1.0) * (1.0 / jnp.sqrt(hidden))

    # Path 1: resident single-pass, pipelined over batch.
    out = jax.block_until_ready(channel_attention(x, w1, w2))
    ref = channel_attention_ref(x, w1, w2)
    assert out.shape == (B, C, H, W)
    assert jnp.allclose(out, ref, atol=2e-3, rtol=2e-3), "resident path mismatch"

    # Path 2: two-phase reduce-then-scale, forced, with a partial last HW tile
    # (exercises the masked final tile and partial output blocks).
    x2 = jax.random.normal(kx2, (B, C, 20, 20), dtype=jnp.float32)
    out2 = jax.block_until_ready(
        channel_attention(x2, w1, w2, force_two_phase=True, hw_tile=128))
    ref2 = channel_attention_ref(x2, w1, w2)
    assert out2.shape == x2.shape
    assert jnp.allclose(out2, ref2, atol=2e-3, rtol=2e-3), "two-phase path mismatch"

    print("KERNEL_OK")
</pallas_src>

<mosaic_0001>
module attributes {stable_mosaic.version = 11 : i64} {
  func.func @_ca_resident_kernel(%arg0: i32, %arg1: memref<1x32x256xf32, #tpu.memory_space<vmem>>, %arg2: memref<32x2xf32, #tpu.memory_space<vmem>>, %arg3: memref<2x32xf32, #tpu.memory_space<vmem>>, %arg4: memref<1x32x256xf32, #tpu.memory_space<vmem>>) attributes {dimension_semantics = [#tpu.dimension_semantics<parallel>], iteration_bounds = array<i64: 2>, scalar_prefetch = 0 : i64, scratch_operands = 0 : i64, tpu.core_type = #tpu.core_type<tc>, window_params = [{transform_indices = @transform_0, window_bounds = array<i64: 1, 32, 256>}, {pipeline_mode = #tpu.pipeline_mode<synchronous>, transform_indices = @transform_1, window_bounds = array<i64: 32, 2>}, {pipeline_mode = #tpu.pipeline_mode<synchronous>, transform_indices = @transform_2, window_bounds = array<i64: 2, 32>}, {transform_indices = @transform_3, window_bounds = array<i64: 1, 32, 256>}]} {
    %c0 = arith.constant 0 : index
    %c0_0 = arith.constant 0 : index
    %c0_1 = arith.constant 0 : index
    %0 = vector.load %arg1[%c0, %c0_0, %c0_1] : memref<1x32x256xf32, #tpu.memory_space<vmem>>, vector<1x32x256xf32>
    %cst = arith.constant dense<0xFF800000> : vector<1x32xf32>
    %1 = vector.multi_reduction <maximumf>, %0, %cst [2] : vector<1x32x256xf32> to vector<1x32xf32>
    %cst_2 = arith.constant dense<0.000000e+00> : vector<1x32xf32>
    %2 = vector.multi_reduction <add>, %0, %cst_2 [2] : vector<1x32x256xf32> to vector<1x32xf32>
    %cst_3 = arith.constant 3.906250e-03 : f32
    %3 = vector.broadcast %cst_3 : f32 to vector<1x32xf32>
    %4 = arith.mulf %2, %3 : vector<1x32xf32>
    %5 = tpu.concatenate %1, %4 in 0 : vector<1x32xf32>, vector<1x32xf32> -> vector<2x32xf32>
    %c0_4 = arith.constant 0 : index
    %c0_5 = arith.constant 0 : index
    %6 = vector.load %arg2[%c0_4, %c0_5] : memref<32x2xf32, #tpu.memory_space<vmem>>, vector<32x2xf32>
    %cst_6 = arith.constant dense<0.000000e+00> : vector<2x2xf32>
    %7 = tpu.matmul %5, %6, %cst_6 {dimension_numbers = #tpu.dot_dimension_numbers<[1], [0], [0], [1], [0, 0, 1, 1], [], []>, precision = #tpu.contract_precision<fp32>} : vector<2x32xf32>, vector<32x2xf32>, vector<2x2xf32> -> vector<2x2xf32>
    %cst_7 = arith.constant 0.000000e+00 : f32
    %8 = vector.broadcast %cst_7 : f32 to vector<2x2xf32>
    %9 = arith.maximumf %7, %8 : vector<2x2xf32>
    %c0_8 = arith.constant 0 : index
    %c0_9 = arith.constant 0 : index
    %10 = vector.load %arg3[%c0_8, %c0_9] : memref<2x32xf32, #tpu.memory_space<vmem>>, vector<2x32xf32>
    %cst_10 = arith.constant dense<0.000000e+00> : vector<2x32xf32>
    %11 = tpu.matmul %9, %10, %cst_10 {dimension_numbers = #tpu.dot_dimension_numbers<[1], [0], [0], [1], [0, 0, 1, 1], [], []>, precision = #tpu.contract_precision<fp32>} : vector<2x2xf32>, vector<2x32xf32>, vector<2x32xf32> -> vector<2x32xf32>
    %12 = vector.extract_strided_slice %11 {offsets = [0, 0], sizes = [1, 32], strides = [1, 1]} : vector<2x32xf32> to vector<1x32xf32>
    %13 = vector.extract_strided_slice %11 {offsets = [1, 0], sizes = [1, 32], strides = [1, 1]} : vector<2x32xf32> to vector<1x32xf32>
    %14 = arith.addf %12, %13 : vector<1x32xf32>
    %15 = math.absf %14 : vector<1x32xf32>
    %cst_11 = arith.constant 0.000000e+00 : f32
    %16 = vector.broadcast %cst_11 : f32 to vector<1x32xf32>
    %17 = arith.subf %16, %15 : vector<1x32xf32>
    %18 = math.exp %17 : vector<1x32xf32>
    %cst_12 = arith.constant 1.000000e+00 : f32
    %19 = vector.broadcast %cst_12 : f32 to vector<1x32xf32>
    %20 = arith.addf %19, %18 : vector<1x32xf32>
    %cst_13 = arith.constant 1.000000e+00 : f32
    %21 = vector.broadcast %cst_13 : f32 to vector<1x32xf32>
    %22 = arith.divf %21, %20 : vector<1x32xf32>
    %cst_14 = arith.constant 0.000000e+00 : f32
    %23 = vector.broadcast %cst_14 : f32 to vector<1x32xf32>
    %24 = arith.cmpf oge, %14, %23 : vector<1x32xf32>
    %cst_15 = arith.constant 1.000000e+00 : f32
    %25 = vector.broadcast %cst_15 : f32 to vector<1x32xf32>
    %26 = arith.subf %25, %22 : vector<1x32xf32>
    %27 = arith.select %24, %22, %26 : vector<1x32xi1>, vector<1x32xf32>
    %c0_16 = arith.constant 0 : index
    %c0_17 = arith.constant 0 : index
    %c0_18 = arith.constant 0 : index
    %28 = vector.load %arg1[%c0_16, %c0_17, %c0_18] : memref<1x32x256xf32, #tpu.memory_space<vmem>>, vector<1x32x256xf32>
    %29 = vector.shape_cast %27 : vector<1x32xf32> to vector<1x32x1xf32>
    %30 = vector.broadcast %29 : vector<1x32x1xf32> to vector<1x32x256xf32>
    %31 = arith.mulf %28, %30 : vector<1x32x256xf32>
    %c0_19 = arith.constant 0 : index
    %c0_20 = arith.constant 0 : index
    %c0_21 = arith.constant 0 : index
    %32 = vector.load %arg4[%c0_19, %c0_20, %c0_21] : memref<1x32x256xf32, #tpu.memory_space<vmem>>, vector<1x32x256xf32>
    tpu.vector_store %arg4[%c0_19, %c0_20, %c0_21], %31 {strides = array<i32>} : memref<1x32x256xf32, #tpu.memory_space<vmem>>, vector<1x32x256xf32>,
    return
  }
  func.func @transform_0(%arg0: i32) -> (i32, i32, i32) {
    %c0_i32 = arith.constant 0 : i32
    %c0_i32_0 = arith.constant 0 : i32
    %c0_i32_1 = arith.constant 0 : i32
    return %arg0, %c0_i32, %c0_i32_0 : i32, i32, i32
  }
  func.func @transform_1(%arg0: i32) -> (i32, i32) {
    %c0_i32 = arith.constant 0 : i32
    %c0_i32_0 = arith.constant 0 : i32
    %c0_i32_1 = arith.constant 0 : i32
    return %c0_i32, %c0_i32_0 : i32, i32
  }
  func.func @transform_2(%arg0: i32) -> (i32, i32) {
    %c0_i32 = arith.constant 0 : i32
    %c0_i32_0 = arith.constant 0 : i32
    %c0_i32_1 = arith.constant 0 : i32
    return %c0_i32, %c0_i32_0 : i32, i32
  }
  func.func @transform_3(%arg0: i32) -> (i32, i32, i32) {
    %c0_i32 = arith.constant 0 : i32
    %c0_i32_0 = arith.constant 0 : i32
    %c0_i32_1 = arith.constant 0 : i32
    return %arg0, %c0_i32, %c0_i32_0 : i32, i32, i32
  }
}

</mosaic_0001>

<llo_original>
// kernel: tpu_custom_call.1
$region0: #{tpu_custom_call.1}
  #allocation0 [shape = 'u32[]', space=smem, size = 0x4, offset = 0x4, fixed_abs, tag = 'smem constant byte address 0x4 - core index']
  #allocation1 [shape = 'u32[144,128]{1,0:T(1,128)}', space=vmem, size = 0x12000, scoped, tag = 'internal scratch']
  %s0 = inlined_call_operand.hbm [shape: f32[2,32,256], index: 0, kind: input, shape index: {}]
  %s1 = inlined_call_operand.vmem [shape: f32[32,2], index: 1, kind: input, shape index: {}]
  %s2 = inlined_call_operand.vmem [shape: f32[2,32], index: 2, kind: input, shape index: {}]
  %s3 = inlined_call_operand.hbm [shape: f32[2,32,256], index: 3, kind: output, shape index: {}]
  %s4 = sld [smem:[#allocation0]]
  $region49: #{tpu_custom_call.1} parent=0
    _
  %s6 = ssub.s32 1, %s4
  %s7 = scalar_select 0, %s6, %s4
  $region1: #{tpu_custom_call.1} parent=0
    #allocation2 [shape = 'u8[65536]{0}', space=vmem, size = 0x10000, scoped, tag = 'input window, operand 0']
    #allocation3 [shape = 's32[2]{0}', space=sflag, size = 0x8, scoped, tag = 'scoped memory for tpu_custom_call.1']
    #allocation4 [shape = 's32[2]{0}', space=sflag, size = 0x8, scoped, tag = 'scoped memory for tpu_custom_call.1']
    #allocation5 [shape = 'u8[65536]{0}', space=vmem, size = 0x10000, scoped, tag = 'output window, operand 0']
    %8 = vsyncpa [#allocation3], 0
    %s9 = scalar_lea.sflag [#allocation3], 1
    %10 = vsyncpa %s9, 0
    %11 = vsyncpa [#allocation4], 0
    %s12 = scalar_lea.sflag [#allocation4], 1
    %13 = vsyncpa %s12, 0
    loop: start=0, step=1, limit=4
    $region2: #{tpu_custom_call.1} parent=1 // loop_pre_header
      _
    $region3: #{tpu_custom_call.1} parent=1 // loop_header
      %s15 = sphi 0, %s19
      %p16 = scmp.ge.s32.totalorder %s15, 4
      %s25 = sphi 0, %s27
      %s28 = sphi 0, %s25
      %s29 = sphi 0, %s28
      %s45 = sphi 0, %s29
      %s49 = sphi 0, %s49
      %s51 = sphi 0, %s49
      %s52 = sphi 0, %s51
      %s66 = sphi 0, %s52
      %s70 = sphi 0, %s70
      %s72 = sphi 0, %s70
      %s73 = sphi 0, %s72
      %s87 = sphi 0, %s73
      %s93 = sphi 0, %s95
      %s96 = sphi 0, %s93
      %s97 = sphi 0, %s96
      %s113 = sphi 0, %s97
    $region4: #{tpu_custom_call.1} parent=1 // loop_header_branch
      %18 = sbr.rel (%p16) target = $region8
    $region5: #{tpu_custom_call.1} parent=1 // loop_body
      %s20 = ssub.s32 %s15, 1
      %s21 = ssub.s32 %s15, 2
      %s22 = sadd.s32 %s15, 1
      %s23 = ssub.s32 %s15, %s22
      %p24 = scmp.eq.s32.totalorder %s23, 0
      %s26 = sadd.s32 %s25, 1
      %s27 = scalar_select %p24, %s25, %s26
      %p30 = pneg %p24
      %p31 = scmp.eq.s32.totalorder %s15, 1
      %p32 = por %p30, %p31
      %p33 = scmp.ne.s32.totalorder %s25, %s28
      %p34 = scmp.eq.s32.totalorder %s15, 0
      %p35 = por %p33, %p34
      %p36 = scmp.ne.s32.totalorder %s25, %s28
      %p37 = scmp.eq.s32.totalorder %s20, 1
      %p38 = por %p36, %p37
      %p39 = scmp.ne.s32.totalorder %s28, %s29
      %p40 = scmp.eq.s32.totalorder %s20, 0
      %p41 = por %p39, %p40
      %p42 = scmp.ne.s32.totalorder %s28, %s29
      %p43 = scmp.eq.s32.totalorder %s21, 1
      %p44 = por %p42, %p43
      %p46 = scmp.ne.s32.totalorder %s29, %s45
      %p47 = scmp.eq.s32.totalorder %s21, 0
      %p48 = por %p46, %p47
      %s50 = sadd.s32 %s49, 1
      %p53 = scmp.eq.s32.totalorder %s15, 1
      %p54 = scmp.ne.s32.totalorder %s49, %s51
      %p55 = scmp.eq.s32.totalorder %s15, 0
      %p56 = por %p54, %p55
      %p57 = scmp.ne.s32.totalorder %s49, %s51
      %p58 = scmp.eq.s32.totalorder %s20, 1
      %p59 = por %p57, %p58
      %p60 = scmp.ne.s32.totalorder %s51, %s52
      %p61 = scmp.eq.s32.totalorder %s20, 0
      %p62 = por %p60, %p61
      %p63 = scmp.ne.s32.totalorder %s51, %s52
      %p64 = scmp.eq.s32.totalorder %s21, 1
      %p65 = por %p63, %p64
      %p67 = scmp.ne.s32.totalorder %s52, %s66
      %p68 = scmp.eq.s32.totalorder %s21, 0
      %p69 = por %p67, %p68
      %s71 = sadd.s32 %s70, 1
      %p74 = scmp.eq.s32.totalorder %s15, 1
      %p75 = scmp.ne.s32.totalorder %s70, %s72
      %p76 = scmp.eq.s32.totalorder %s15, 0
      %p77 = por %p75, %p76
      %p78 = scmp.ne.s32.totalorder %s70, %s72
      %p79 = scmp.eq.s32.totalorder %s20, 1
      %p80 = por %p78, %p79
      %p81 = scmp.ne.s32.totalorder %s72, %s73
      %p82 = scmp.eq.s32.totalorder %s20, 0
      %p83 = por %p81, %p82
      %p84 = scmp.ne.s32.totalorder %s72, %s73
      %p85 = scmp.eq.s32.totalorder %s21, 1
      %p86 = por %p84, %p85
      %p88 = scmp.ne.s32.totalorder %s73, %s87
      %p89 = scmp.eq.s32.totalorder %s21, 0
      %p90 = por %p88, %p89
      %s91 = ssub.s32 %s15, %s22
      %p92 = scmp.eq.s32.totalorder %s91, 0
      %s94 = sadd.s32 %s93, 1
      %s95 = scalar_select %p92, %s93, %s94
      %p98 = pneg %p92
      %p99 = scmp.eq.s32.totalorder %s15, 1
      %p100 = por %p98, %p99
      %p101 = scmp.ne.s32.totalorder %s93, %s96
      %p102 = scmp.eq.s32.totalorder %s15, 0
      %p103 = por %p101, %p102
      %p104 = scmp.ne.s32.totalorder %s93, %s96
      %p105 = scmp.eq.s32.totalorder %s20, 1
      %p106 = por %p104, %p105
      %p107 = scmp.ne.s32.totalorder %s96, %s97
      %p108 = scmp.eq.s32.totalorder %s20, 0
      %p109 = por %p107, %p108
      %p110 = scmp.ne.s32.totalorder %s96, %s97
      %p111 = scmp.eq.s32.totalorder %s21, 1
      %p112 = por %p110, %p111
      %p114 = scmp.ne.s32.totalorder %s97, %s113
      %p115 = scmp.eq.s32.totalorder %s21, 0
      %p116 = por %p114, %p115
      %p117 = scmp.le.s32.totalorder 1, %s15
      %p118 = scmp.lt.s32.totalorder %s15, 3
      %p119 = pnand %p117, %p118
      %p120 = pneg %p119
      // Predicated region
      $region9: #{tpu_custom_call.1} parent=5 // pred_check
        _
      $region10: #{tpu_custom_call.1} parent=5 // pred_check_branch
        %122 = sbr.rel (%p119) target = $region12
      $region11: #{tpu_custom_call.1} parent=5 // pred_region
        %s123 = ssub.s32 %s15, 1
        // Predicated region
        $region13: #{tpu_custom_call.1} parent=11 // pred_check
          %p124 = pneg %p62
        $region14: #{tpu_custom_call.1} parent=11 // pred_check_branch
          %126 = sbr.rel (%p124) target = $region16
        $region15: #{tpu_custom_call.1} parent=11 // pred_region
          _
        $region16: #{tpu_custom_call.1} parent=11 // pred_fallthru
          _
        // Predicated region
        $region17: #{tpu_custom_call.1} parent=11 // pred_check
          %p127 = pneg %p83
        $region18: #{tpu_custom_call.1} parent=11 // pred_check_branch
          %129 = sbr.rel (%p127) target = $region20
        $region19: #{tpu_custom_call.1} parent=11 // pred_region
          _
        $region20: #{tpu_custom_call.1} parent=11 // pred_fallthru
          _
      $region12: #{tpu_custom_call.1} parent=5 // pred_fallthru
        _
      %p130 = scmp.lt.s32.totalorder %s15, 2
      // Predicated region
      $region21: #{tpu_custom_call.1} parent=5 // pred_check
        %p131 = pneg %p130
      $region22: #{tpu_custom_call.1} parent=5 // pred_check_branch
        %133 = sbr.rel (%p131) target = $region24
      $region23: #{tpu_custom_call.1} parent=5 // pred_region
        // Predicated region
        $region25: #{tpu_custom_call.1} parent=23 // pred_check
          %p134 = pneg %p35
        $region26: #{tpu_custom_call.1} parent=23 // pred_check_branch
          %136 = sbr.rel (%p134) target = $region28
        $region27: #{tpu_custom_call.1} parent=23 // pred_region
          %s137 = sand.u32 %s25, 1
          %s138 = scalar_lea.sflag [#allocation3], %s137
          %s139 = sand.u32 %s25, 1
          %s140 = smul.addr %s139, 64
          %s141 = scalar_lea.vmem [#allocation2], %s140
          %s143 = ssub.s32 1024, 1024
          %144 = vsyncadd %s138, %s143
          %s145 = smul.addr %s15, 8
          %s146 = smul.addr %s145, 128
          %s147 = scalar_lea.hbm %s0, %s146
          %s148 = sshll.u32 %s141, 4
          %s149 = int_to_ptr.vmem [resolvable:$true] %s148
          %154 = dma.hbm_to_vmem [thread:$0]  %s147, 1024, %s149, %s138, 256, 256, 16
        $region28: #{tpu_custom_call.1} parent=23 // pred_fallthru
          _
      $region24: #{tpu_custom_call.1} parent=5 // pred_fallthru
        _
      %p155 = scmp.le.s32.totalorder 1, %s15
      %p156 = scmp.lt.s32.totalorder %s15, 3
      %p157 = pnand %p155, %p156
      %p158 = pneg %p157
      // Predicated region
      $region29: #{tpu_custom_call.1} parent=5 // pred_check
        _
      $region30: #{tpu_custom_call.1} parent=5 // pred_check_branch
        %160 = sbr.rel (%p157) target = $region32
      $region31: #{tpu_custom_call.1} parent=5 // pred_region
        %s161 = ssub.s32 %s15, 1
        %s162 = sand.u32 %s28, 1
        %s163 = scalar_lea.sflag [#allocation3], %s162
        %s164 = sand.u32 %s28, 1
        %s165 = smul.addr %s164, 64
        %s166 = scalar_lea.vmem [#allocation2], %s165
        // Predicated region
        $region33: #{tpu_custom_call.1} parent=31 // pred_check
          %p167 = pneg %p41
        $region34: #{tpu_custom_call.1} parent=31 // pred_check_branch
          %169 = sbr.rel (%p167) target = $region36
        $region35: #{tpu_custom_call.1} parent=31 // pred_region
          %170 = dma.done %s163, 1024
        $region36: #{tpu_custom_call.1} parent=31 // pred_fallthru
          _
        %s171 = sand.u32 %s28, 1
        %s172 = scalar_lea.sflag [#allocation3], %s171
        %s173 = sand.u32 %s28, 1
        %s174 = smul.addr %s173, 64
        %s175 = scalar_lea.vmem [#allocation2], %s174
        %p176 = pneg %p41
        %p177 = pneg %p38
        %p178 = pneg %p62
        %p179 = pneg %p59
        %p180 = pneg %p83
        %p181 = pneg %p80
        %p182 = pneg %p109
        %p183 = pneg %p106
        %s184 = sand.u32 %s96, 1
        %s185 = scalar_lea.sflag [#allocation4], %s184
        %s186 = sand.u32 %s96, 1
        %s187 = smul.addr %s186, 64
        %s188 = scalar_lea.vmem [#allocation5], %s187
        %v189 = vld [vmem:[%s166] sm:$0xff]
        %v190 = vld [vmem:[%s166 + $0x8] sm:$0xff]
        %v191 = vld [vmem:[%s166 + $0x10] sm:$0xff]
        %v192 = vld [vmem:[%s166 + $0x18] sm:$0xff]
        %v193 = vld [vmem:[%s166 + $0x20] sm:$0xff]
        %v194 = vld [vmem:[%s166 + $0x28] sm:$0xff]
        %v195 = vld [vmem:[%s166 + $0x30] sm:$0xff]
        %v196 = vld [vmem:[%s166 + $0x38] sm:$0xff]
        %v197 = vmax.f32 %v189, %v190
        %198 = vmax.xlane.f32.xlu0 %v197
        %v199 = vpop.xlane.xlu0 %198
        %v200 = vmax.f32 %v191, %v192
        %201 = vmax.xlane.f32.xlu0 %v200
        %v202 = vpop.xlane.xlu0 %201
        %v203 = vmax.f32 %v193, %v194
        %204 = vmax.xlane.f32.xlu0 %v203
        %v205 = vpop.xlane.xlu0 %204
        %v206 = vmax.f32 %v195, %v196
        %207 = vmax.xlane.f32.xlu0 %v206
        %v208 = vpop.xlane.xlu0 %207
        %v209 = vadd.f32 %v189, %v190
        %210 = vadd.xlane.f32.xlu0 %v209
        %v211 = vpop.xlane.xlu0 %210
        %v212 = vadd.f32 %v191, %v192
        %213 = vadd.xlane.f32.xlu0 %v212
        %v214 = vpop.xlane.xlu0 %213
        %v215 = vadd.f32 %v193, %v194
        %216 = vadd.xlane.f32.xlu0 %v215
        %v217 = vpop.xlane.xlu0 %216
        %v218 = vadd.f32 %v195, %v196
        %219 = vadd.xlane.f32.xlu0 %v218
        %v220 = vpop.xlane.xlu0 %219
        %v221 = vmul.f32 %v211, 0.00390625
        %v222 = vmul.f32 %v214, 0.00390625
        %v223 = vmul.f32 %v217, 0.00390625
        %v224 = vmul.f32 %v220, 0.00390625
        %v229 = vlaneseq
        %v230 = vand.u32 %v229, 127
        %v231 = vlaneseq
        %v232 = vshrl.u32 %v231, 7
        %v233 = vsub.s32 %v230, %v232
        %v234 = vrot.slane %v199, %v233
        %v235 = vadd.s32 %v230, 4294967288
        %v236 = vlaneseq
        %v237 = vshrl.u32 %v236, 7
        %v238 = vsub.s32 %v235, %v237
        %v239 = vrot.slane %v202, %v238
        %vm240 = vcmask 130112
        %v241 = vsel %vm240, %v239, %v234
        %v242 = vadd.s32 %v230, 4294967280
        %v243 = vlaneseq
        %v244 = vshrl.u32 %v243, 7
        %v245 = vsub.s32 %v242, %v244
        %v246 = vrot.slane %v205, %v245
        %vm247 = vcmask 195712
        %v248 = vsel %vm247, %v246, %v241
        %v249 = vadd.s32 %v230, 4294967272
        %v250 = vlaneseq
        %v251 = vshrl.u32 %v250, 7
        %v252 = vsub.s32 %v249, %v251
        %v253 = vrot.slane %v208, %v252
        %vm254 = vcmask 261312
        %v255 = vsel %vm254, %v253, %v248
        %v261 = vlaneseq
        %v262 = vshrl.u32 %v261, 7
        %v263 = vsub.s32 %v230, %v262
        %v264 = vrot.slane %v221, %v263
        %v265 = vlaneseq
        %v266 = vshrl.u32 %v265, 7
        %v267 = vsub.s32 %v235, %v266
        %v268 = vrot.slane %v222, %v267
        %v269 = vsel %vm240, %v268, %v264
        %v270 = vlaneseq
        %v271 = vshrl.u32 %v270, 7
        %v272 = vsub.s32 %v242, %v271
        %v273 = vrot.slane %v223, %v272
        %v274 = vsel %vm247, %v273, %v269
        %v275 = vlaneseq
        %v276 = vshrl.u32 %v275, 7
        %v277 = vsub.s32 %v249, %v276
        %v278 = vrot.slane %v224, %v277
        %v279 = vsel %vm254, %v278, %v274
        %vm281 = vcmask 1040384
        %v282 = vsel %vm281, %v255, %v279
        %v283 = vld [vmem:[%s1] sm:$0xff]
        %v284 = vld [vmem:[%s1 + $0x8] sm:$0xff]
        %v285 = vld [vmem:[%s1 + $0x10] sm:$0xff]
        %v286 = vld [vmem:[%s1 + $0x18] sm:$0xff]
        %vm287 = vcmask 261120
        %v289 = vsel %vm287, %v282, 0
        %291 = vmatprep.subr.mxu0 0.0
        %v292 = vand.u32 %v283, 4294901760
        %293 = vmatpush1.msra.mxu0 %v292
        %294 = vmatprep.subr.mxu0 0.0
        %v295 = vand.u32 %v284, 4294901760
        %296 = vmatpush1.msra.mxu0 %v295
        %297 = vmatprep.subr.mxu0 0.0
        %v298 = vand.u32 %v285, 4294901760
        %299 = vmatpush1.msra.mxu0 %v298
        %300 = vmatprep.subr.mxu0 0.0
        %v301 = vand.u32 %v286, 4294901760
        %302 = vmatpush1.msra.mxu0 %v301
        %303 = vmatprep.subr.mxu0 0.0
        %304 = vmatpush1.msra.mxu0 0.0
        %305 = vmatprep.subr.mxu0 0.0
        %306 = vmatpush1.msra.mxu0 0.0
        %307 = vmatprep.subr.mxu0 0.0
        %308 = vmatpush1.msra.mxu0 0.0
        %309 = vmatprep.subr.mxu0 0.0
        %310 = vmatpush1.msra.mxu0 0.0
        %311 = vmatprep.subr.mxu0 0.0
        %312 = vmatpush1.msra.mxu0 0.0
        %313 = vmatprep.subr.mxu0 0.0
        %314 = vmatpush1.msra.mxu0 0.0
        %315 = vmatprep.subr.mxu0 0.0
        %316 = vmatpush1.msra.mxu0 0.0
        %317 = vmatprep.subr.mxu0 0.0
        %318 = vmatpush1.msra.mxu0 0.0
        %319 = vmatprep.subr.mxu0 0.0
        %320 = vmatpush1.msra.mxu0 0.0
        %321 = vmatprep.subr.mxu0 0.0
        %322 = vmatpush1.msra.mxu0 0.0
        %323 = vmatprep.subr.mxu0 0.0
        %324 = vmatpush1.msra.mxu0 0.0
        %325 = vmatprep.subr.mxu0 0.0
        %326 = vmatpush1.msra.mxu0 0.0
        %327 = vmatprep.subr.mxu0 0.0
        %328 = vmatpush1.msra.mxu0 0.0
        %329 = vmatprep.subr.mxu0 0.0
        %330 = vmatpush1.msra.mxu0 0.0
        %331 = vmatprep.subr.mxu0 0.0
        %332 = vmatpush1.msra.mxu0 0.0
        %333 = vmatprep.subr.mxu0 0.0
        %334 = vmatpush1.msra.mxu0 0.0
        %335 = vmatprep.subr.mxu0 0.0
        %336 = vmatpush1.msra.mxu0 0.0
        %337 = vmatprep.subr.mxu0 0.0
        %338 = vmatpush1.msra.mxu0 0.0
        %339 = vmatprep.subr.mxu0 0.0
        %340 = vmatpush1.msra.mxu0 0.0
        %341 = vmatprep.subr.mxu0 0.0
        %342 = vmatpush1.msra.mxu0 0.0
        %343 = vmatprep.subr.mxu0 0.0
        %344 = vmatpush1.msra.mxu0 0.0
        %345 = vmatprep.subr.mxu0 0.0
        %346 = vmatpush1.msra.mxu0 0.0
        %347 = vmatprep.subr.mxu0 0.0
        %348 = vmatpush1.msra.mxu0 0.0
        %349 = vmatprep.subr.mxu0 0.0
        %350 = vmatpush1.msra.mxu0 0.0
        %351 = vmatprep.subr.mxu0 0.0
        %352 = vmatpush1.msra.mxu0 0.0
        %353 = vmatprep.subr.mxu0 0.0
        %354 = vmatpush1.msra.mxu0 0.0
        %355 = vmatprep.subr.mxu0 0.0
        %356 = vmatpush1.msra.mxu0 0.0
        %357 = vmatprep.subr.mxu0 0.0
        %358 = vmatpush1.msra.mxu0 0.0
        %359 = vmatprep.mubr.f32.mxu0 0.0
        %v360 = vand.u32 %v289, 4294901760
        %v361 = vsub.f32 %v289, %v360
        %v362 = vand.u32 %v361, 4294901760
        %v363 = vsub.f32 %v361, %v362
        %v364 = vand.u32 %v363, 4294901760
        %365 = vmatmul.mubr.f32.gmra.mrb[0].mxu0 %v364
        %v366 = vpop.f32.mrb[0].mxu0
        %v367 = vadd.f32 0.0, %v366
        %v368 = vpop.f32.mrb[0].mxu0
        %369 = vdwg.mxu0
        %370 = vmatprep.subr.mxu0 0.0
        %v371 = vand.u32 %v283, 4294901760
        %v372 = vsub.f32 %v283, %v371
        %v373 = vand.u32 %v372, 4294901760
        %v374 = vsub.f32 %v372, %v373
        %v375 = vand.u32 %v374, 4294901760
        %376 = vmatpush1.msra.mxu0 %v375
        %377 = vmatprep.subr.mxu0 0.0
        %v378 = vand.u32 %v284, 4294901760
        %v379 = vsub.f32 %v284, %v378
        %v380 = vand.u32 %v379, 4294901760
        %v381 = vsub.f32 %v379, %v380
        %v382 = vand.u32 %v381, 4294901760
        %383 = vmatpush1.msra.mxu0 %v382
        %384 = vmatprep.subr.mxu0 0.0
        %v385 = vand.u32 %v285, 4294901760
        %v386 = vsub.f32 %v285, %v385
        %v387 = vand.u32 %v386, 4294901760
        %v388 = vsub.f32 %v386, %v387
        %v389 = vand.u32 %v388, 4294901760
        %390 = vmatpush1.msra.mxu0 %v389
        %391 = vmatprep.subr.mxu0 0.0
        %v392 = vand.u32 %v286, 4294901760
        %v393 = vsub.f32 %v286, %v392
        %v394 = vand.u32 %v393, 4294901760
        %v395 = vsub.f32 %v393, %v394
        %v396 = vand.u32 %v395, 4294901760
        %397 = vmatpush1.msra.mxu0 %v396
        %398 = vmatprep.subr.mxu0 0.0
        %399 = vmatpush1.msra.mxu0 0.0
        %400 = vmatprep.subr.mxu0 0.0
        %401 = vmatpush1.msra.mxu0 0.0
        %402 = vmatprep.subr.mxu0 0.0
        %403 = vmatpush1.msra.mxu0 0.0
        %404 = vmatprep.subr.mxu0 0.0
        %405 = vmatpush1.msra.mxu0 0.0
        %406 = vmatprep.subr.mxu0 0.0
        %407 = vmatpush1.msra.mxu0 0.0
        %408 = vmatprep.subr.mxu0 0.0
        %409 = vmatpush1.msra.mxu0 0.0
        %410 = vmatprep.subr.mxu0 0.0
        %411 = vmatpush1.msra.mxu0 0.0
        %412 = vmatprep.subr.mxu0 0.0
        %413 = vmatpush1.msra.mxu0 0.0
        %414 = vmatprep.subr.mxu0 0.0
        %415 = vmatpush1.msra.mxu0 0.0
        %416 = vmatprep.subr.mxu0 0.0
        %417 = vmatpush1.msra.mxu0 0.0
        %418 = vmatprep.subr.mxu0 0.0
        %419 = vmatpush1.msra.mxu0 0.0
        %420 = vmatprep.subr.mxu0 0.0
        %421 = vmatpush1.msra.mxu0 0.0
        %422 = vmatprep.subr.mxu0 0.0
        %423 = vmatpush1.msra.mxu0 0.0
        %424 = vmatprep.subr.mxu0 0.0
        %425 = vmatpush1.msra.mxu0 0.0
        %426 = vmatprep.subr.mxu0 0.0
        %427 = vmatpush1.msra.mxu0 0.0
        %428 = vmatprep.subr.mxu0 0.0
        %429 = vmatpush1.msra.mxu0 0.0
        %430 = vmatprep.subr.mxu0 0.0
        %431 = vmatpush1.msra.mxu0 0.0
        %432 = vmatprep.subr.mxu0 0.0
        %433 = vmatpush1.msra.mxu0 0.0
        %434 = vmatprep.subr.mxu0 0.0
        %435 = vmatpush1.msra.mxu0 0.0
        %436 = vmatprep.subr.mxu0 0.0
        %437 = vmatpush1.msra.mxu0 0.0
        %438 = vmatprep.subr.mxu0 0.0
        %439 = vmatpush1.msra.mxu0 0.0
        %440 = vmatprep.subr.mxu0 0.0
        %441 = vmatpush1.msra.mxu0 0.0
        %442 = vmatprep.subr.mxu0 0.0
        %443 = vmatpush1.msra.mxu0 0.0
        %444 = vmatprep.subr.mxu0 0.0
        %445 = vmatpush1.msra.mxu0 0.0
        %446 = vmatprep.subr.mxu0 0.0
        %447 = vmatpush1.msra.mxu0 0.0
        %448 = vmatprep.subr.mxu0 0.0
        %449 = vmatpush1.msra.mxu0 0.0
        %450 = vmatprep.subr.mxu0 0.0
        %451 = vmatpush1.msra.mxu0 0.0
        %452 = vmatprep.subr.mxu0 0.0
        %453 = vmatpush1.msra.mxu0 0.0
        %454 = vmatprep.mubr.f32.mxu0 0.0
        %v455 = vand.u32 %v289, 4294901760
        %456 = vmatmul.mubr.f32.gmra.mrb[0].mxu0 %v455
        %v457 = vpop.f32.mrb[0].mxu0
        %v458 = vadd.f32 %v367, %v457
        %v459 = vpop.f32.mrb[0].mxu0
        %460 = vdwg.mxu0
        %461 = vmatprep.subr.mxu0 0.0
        %v462 = vand.u32 %v283, 4294901760
        %v463 = vsub.f32 %v283, %v462
        %464 = vmatpush1.msra.mxu0 %v463
        %465 = vmatprep.subr.mxu0 0.0
        %v466 = vand.u32 %v284, 4294901760
        %v467 = vsub.f32 %v284, %v466
        %468 = vmatpush1.msra.mxu0 %v467
        %469 = vmatprep.subr.mxu0 0.0
        %v470 = vand.u32 %v285, 4294901760
        %v471 = vsub.f32 %v285, %v470
        %472 = vmatpush1.msra.mxu0 %v471
        %473 = vmatprep.subr.mxu0 0.0
        %v474 = vand.u32 %v286, 4294901760
        %v475 = vsub.f32 %v286, %v474
        %476 = vmatpush1.msra.mxu0 %v475
        %477 = vmatprep.subr.mxu0 0.0
        %478 = vmatpush1.msra.mxu0 0.0
        %479 = vmatprep.subr.mxu0 0.0
        %480 = vmatpush1.msra.mxu0 0.0
        %481 = vmatprep.subr.mxu0 0.0
        %482 = vmatpush1.msra.mxu0 0.0
        %483 = vmatprep.subr.mxu0 0.0
        %484 = vmatpush1.msra.mxu0 0.0
        %485 = vmatprep.subr.mxu0 0.0
        %486 = vmatpush1.msra.mxu0 0.0
        %487 = vmatprep.subr.mxu0 0.0
        %488 = vmatpush1.msra.mxu0 0.0
        %489 = vmatprep.subr.mxu0 0.0
        %490 = vmatpush1.msra.mxu0 0.0
        %491 = vmatprep.subr.mxu0 0.0
        %492 = vmatpush1.msra.mxu0 0.0
        %493 = vmatprep.subr.mxu0 0.0
        %494 = vmatpush1.msra.mxu0 0.0
        %495 = vmatprep.subr.mxu0 0.0
        %496 = vmatpush1.msra.mxu0 0.0
        %497 = vmatprep.subr.mxu0 0.0
        %498 = vmatpush1.msra.mxu0 0.0
        %499 = vmatprep.subr.mxu0 0.0
        %500 = vmatpush1.msra.mxu0 0.0
        %501 = vmatprep.subr.mxu0 0.0
        %502 = vmatpush1.msra.mxu0 0.0
        %503 = vmatprep.subr.mxu0 0.0
        %504 = vmatpush1.msra.mxu0 0.0
        %505 = vmatprep.subr.mxu0 0.0
        %506 = vmatpush1.msra.mxu0 0.0
        %507 = vmatprep.subr.mxu0 0.0
        %508 = vmatpush1.msra.mxu0 0.0
        %509 = vmatprep.subr.mxu0 0.0
        %510 = vmatpush1.msra.mxu0 0.0
        %511 = vmatprep.subr.mxu0 0.0
        %512 = vmatpush1.msra.mxu0 0.0
        %513 = vmatprep.subr.mxu0 0.0
        %514 = vmatpush1.msra.mxu0 0.0
        %515 = vmatprep.subr.mxu0 0.0
        %516 = vmatpush1.msra.mxu0 0.0
        %517 = vmatprep.subr.mxu0 0.0
        %518 = vmatpush1.msra.mxu0 0.0
        %519 = vmatprep.subr.mxu0 0.0
        %520 = vmatpush1.msra.mxu0 0.0
        %521 = vmatprep.subr.mxu0 0.0
        %522 = vmatpush1.msra.mxu0 0.0
        %523 = vmatprep.subr.mxu0 0.0
        %524 = vmatpush1.msra.mxu0 0.0
        %525 = vmatprep.subr.mxu0 0.0
        %526 = vmatpush1.msra.mxu0 0.0
        %527 = vmatprep.subr.mxu0 0.0
        %528 = vmatpush1.msra.mxu0 0.0
        %529 = vmatprep.subr.mxu0 0.0
        %530 = vmatpush1.msra.mxu0 0.0
        %531 = vmatprep.subr.mxu0 0.0
        %532 = vmatpush1.msra.mxu0 0.0
        %533 = vmatprep.mubr.f32.mxu0 0.0
        %v534 = vand.u32 %v289, 4294901760
        %v535 = vsub.f32 %v289, %v534
        %536 = vmatmul.mubr.f32.gmra.mrb[0].mxu0 %v535
        %v537 = vpop.f32.mrb[0].mxu0
        %v538 = vadd.f32 %v458, %v537
        %v539 = vpop.f32.mrb[0].mxu0
        %540 = vdwg.mxu0
        %541 = vmatprep.subr.mxu0 0.0
        %v542 = vand.u32 %v283, 4294901760
        %543 = vmatpush1.msra.mxu0 %v542
        %544 = vmatprep.subr.mxu0 0.0
        %v545 = vand.u32 %v284, 4294901760
        %546 = vmatpush1.msra.mxu0 %v545
        %547 = vmatprep.subr.mxu0 0.0
        %v548 = vand.u32 %v285, 4294901760
        %549 = vmatpush1.msra.mxu0 %v548
        %550 = vmatprep.subr.mxu0 0.0
        %v551 = vand.u32 %v286, 4294901760
        %552 = vmatpush1.msra.mxu0 %v551
        %553 = vmatprep.subr.mxu0 0.0
        %554 = vmatpush1.msra.mxu0 0.0
        %555 = vmatprep.subr.mxu0 0.0
        %556 = vmatpush1.msra.mxu0 0.0
        %557 = vmatprep.subr.mxu0 0.0
        %558 = vmatpush1.msra.mxu0 0.0
        %559 = vmatprep.subr.mxu0 0.0
        %560 = vmatpush1.msra.mxu0 0.0
        %561 = vmatprep.subr.mxu0 0.0
        %562 = vmatpush1.msra.mxu0 0.0
        %563 = vmatprep.subr.mxu0 0.0
        %564 = vmatpush1.msra.mxu0 0.0
        %565 = vmatprep.subr.mxu0 0.0
        %566 = vmatpush1.msra.mxu0 0.0
        %567 = vmatprep.subr.mxu0 0.0
        %568 = vmatpush1.msra.mxu0 0.0
        %569 = vmatprep.subr.mxu0 0.0
        %570 = vmatpush1.msra.mxu0 0.0
        %571 = vmatprep.subr.mxu0 0.0
        %572 = vmatpush1.msra.mxu0 0.0
        %573 = vmatprep.subr.mxu0 0.0
        %574 = vmatpush1.msra.mxu0 0.0
        %575 = vmatprep.subr.mxu0 0.0
        %576 = vmatpush1.msra.mxu0 0.0
        %577 = vmatprep.subr.mxu0 0.0
        %578 = vmatpush1.msra.mxu0 0.0
        %579 = vmatprep.subr.mxu0 0.0
        %580 = vmatpush1.msra.mxu0 0.0
        %581 = vmatprep.subr.mxu0 0.0
        %582 = vmatpush1.msra.mxu0 0.0
        %583 = vmatprep.subr.mxu0 0.0
        %584 = vmatpush1.msra.mxu0 0.0
        %585 = vmatprep.subr.mxu0 0.0
        %586 = vmatpush1.msra.mxu0 0.0
        %587 = vmatprep.subr.mxu0 0.0
        %588 = vmatpush1.msra.mxu0 0.0
        %589 = vmatprep.subr.mxu0 0.0
        %590 = vmatpush1.msra.mxu0 0.0
        %591 = vmatprep.subr.mxu0 0.0
        %592 = vmatpush1.msra.mxu0 0.0
        %593 = vmatprep.subr.mxu0 0.0
        %594 = vmatpush1.msra.mxu0 0.0
        %595 = vmatprep.subr.mxu0 0.0
        %596 = vmatpush1.msra.mxu0 0.0
        %597 = vmatprep.subr.mxu0 0.0
        %598 = vmatpush1.msra.mxu0 0.0
        %599 = vmatprep.subr.mxu0 0.0
        %600 = vmatpush1.msra.mxu0 0.0
        %601 = vmatprep.subr.mxu0 0.0
        %602 = vmatpush1.msra.mxu0 0.0
        %603 = vmatprep.subr.mxu0 0.0
        %604 = vmatpush1.msra.mxu0 0.0
        %605 = vmatprep.subr.mxu0 0.0
        %606 = vmatpush1.msra.mxu0 0.0
        %607 = vmatprep.subr.mxu0 0.0
        %608 = vmatpush1.msra.mxu0 0.0
        %609 = vmatprep.mubr.f32.mxu0 0.0
        %v610 = vand.u32 %v289, 4294901760
        %v611 = vsub.f32 %v289, %v610
        %v612 = vand.u32 %v611, 4294901760
        %613 = vmatmul.mubr.f32.gmra.mrb[0].mxu0 %v612
        %v614 = vpop.f32.mrb[0].mxu0
        %v615 = vadd.f32 %v538, %v614
        %v616 = vpop.f32.mrb[0].mxu0
        %617 = vdwg.mxu0
        %618 = vmatprep.subr.mxu0 0.0
        %v619 = vand.u32 %v283, 4294901760
        %v620 = vsub.f32 %v283, %v619
        %v621 = vand.u32 %v620, 4294901760
        %622 = vmatpush1.msra.mxu0 %v621
        %623 = vmatprep.subr.mxu0 0.0
        %v624 = vand.u32 %v284, 4294901760
        %v625 = vsub.f32 %v284, %v624
        %v626 = vand.u32 %v625, 4294901760
        %627 = vmatpush1.msra.mxu0 %v626
        %628 = vmatprep.subr.mxu0 0.0
        %v629 = vand.u32 %v285, 4294901760
        %v630 = vsub.f32 %v285, %v629
        %v631 = vand.u32 %v630, 4294901760
        %632 = vmatpush1.msra.mxu0 %v631
        %633 = vmatprep.subr.mxu0 0.0
        %v634 = vand.u32 %v286, 4294901760
        %v635 = vsub.f32 %v286, %v634
        %v636 = vand.u32 %v635, 4294901760
        %637 = vmatpush1.msra.mxu0 %v636
        %638 = vmatprep.subr.mxu0 0.0
        %639 = vmatpush1.msra.mxu0 0.0
        %640 = vmatprep.subr.mxu0 0.0
        %641 = vmatpush1.msra.mxu0 0.0
        %642 = vmatprep.subr.mxu0 0.0
        %643 = vmatpush1.msra.mxu0 0.0
        %644 = vmatprep.subr.mxu0 0.0
        %645 = vmatpush1.msra.mxu0 0.0
        %646 = vmatprep.subr.mxu0 0.0
        %647 = vmatpush1.msra.mxu0 0.0
        %648 = vmatprep.subr.mxu0 0.0
        %649 = vmatpush1.msra.mxu0 0.0
        %650 = vmatprep.subr.mxu0 0.0
        %651 = vmatpush1.msra.mxu0 0.0
        %652 = vmatprep.subr.mxu0 0.0
        %653 = vmatpush1.msra.mxu0 0.0
        %654 = vmatprep.subr.mxu0 0.0
        %655 = vmatpush1.msra.mxu0 0.0
        %656 = vmatprep.subr.mxu0 0.0
        %657 = vmatpush1.msra.mxu0 0.0
        %658 = vmatprep.subr.mxu0 0.0
        %659 = vmatpush1.msra.mxu0 0.0
        %660 = vmatprep.subr.mxu0 0.0
        %661 = vmatpush1.msra.mxu0 0.0
        %662 = vmatprep.subr.mxu0 0.0
        %663 = vmatpush1.msra.mxu0 0.0
        %664 = vmatprep.subr.mxu0 0.0
        %665 = vmatpush1.msra.mxu0 0.0
        %666 = vmatprep.subr.mxu0 0.0
        %667 = vmatpush1.msra.mxu0 0.0
        %668 = vmatprep.subr.mxu0 0.0
        %669 = vmatpush1.msra.mxu0 0.0
        %670 = vmatprep.subr.mxu0 0.0
        %671 = vmatpush1.msra.mxu0 0.0
        %672 = vmatprep.subr.mxu0 0.0
        %673 = vmatpush1.msra.mxu0 0.0
        %674 = vmatprep.subr.mxu0 0.0
        %675 = vmatpush1.msra.mxu0 0.0
        %676 = vmatprep.subr.mxu0 0.0
        %677 = vmatpush1.msra.mxu0 0.0
        %678 = vmatprep.subr.mxu0 0.0
        %679 = vmatpush1.msra.mxu0 0.0
        %680 = vmatprep.subr.mxu0 0.0
        %681 = vmatpush1.msra.mxu0 0.0
        %682 = vmatprep.subr.mxu0 0.0
        %683 = vmatpush1.msra.mxu0 0.0
        %684 = vmatprep.subr.mxu0 0.0
        %685 = vmatpush1.msra.mxu0 0.0
        %686 = vmatprep.subr.mxu0 0.0
        %687 = vmatpush1.msra.mxu0 0.0
        %688 = vmatprep.subr.mxu0 0.0
        %689 = vmatpush1.msra.mxu0 0.0
        %690 = vmatprep.subr.mxu0 0.0
        %691 = vmatpush1.msra.mxu0 0.0
        %692 = vmatprep.subr.mxu0 0.0
        %693 = vmatpush1.msra.mxu0 0.0
        %694 = vmatprep.mubr.f32.mxu0 0.0
        %v695 = vand.u32 %v289, 4294901760
        %696 = vmatmul.mubr.f32.gmra.mrb[0].mxu0 %v695
        %v697 = vpop.f32.mrb[0].mxu0
        %v698 = vadd.f32 %v615, %v697
        %v699 = vpop.f32.mrb[0].mxu0
        %700 = vdwg.mxu0
        %701 = vmatprep.subr.mxu0 0.0
        %v702 = vand.u32 %v283, 4294901760
        %703 = vmatpush1.msra.mxu0 %v702
        %704 = vmatprep.subr.mxu0 0.0
        %v705 = vand.u32 %v284, 4294901760
        %706 = vmatpush1.msra.mxu0 %v705
        %707 = vmatprep.subr.mxu0 0.0
        %v708 = vand.u32 %v285, 4294901760
        %709 = vmatpush1.msra.mxu0 %v708
        %710 = vmatprep.subr.mxu0 0.0
        %v711 = vand.u32 %v286, 4294901760
        %712 = vmatpush1.msra.mxu0 %v711
        %713 = vmatprep.subr.mxu0 0.0
        %714 = vmatpush1.msra.mxu0 0.0
        %715 = vmatprep.subr.mxu0 0.0
        %716 = vmatpush1.msra.mxu0 0.0
        %717 = vmatprep.subr.mxu0 0.0
        %718 = vmatpush1.msra.mxu0 0.0
        %719 = vmatprep.subr.mxu0 0.0
        %720 = vmatpush1.msra.mxu0 0.0
        %721 = vmatprep.subr.mxu0 0.0
        %722 = vmatpush1.msra.mxu0 0.0
        %723 = vmatprep.subr.mxu0 0.0
        %724 = vmatpush1.msra.mxu0 0.0
        %725 = vmatprep.subr.mxu0 0.0
        %726 = vmatpush1.msra.mxu0 0.0
        %727 = vmatprep.subr.mxu0 0.0
        %728 = vmatpush1.msra.mxu0 0.0
        %729 = vmatprep.subr.mxu0 0.0
        %730 = vmatpush1.msra.mxu0 0.0
        %731 = vmatprep.subr.mxu0 0.0
        %732 = vmatpush1.msra.mxu0 0.0
        %733 = vmatprep.subr.mxu0 0.0
        %734 = vmatpush1.msra.mxu0 0.0
        %735 = vmatprep.subr.mxu0 0.0
        %736 = vmatpush1.msra.mxu0 0.0
        %737 = vmatprep.subr.mxu0 0.0
        %738 = vmatpush1.msra.mxu0 0.0
        %739 = vmatprep.subr.mxu0 0.0
        %740 = vmatpush1.msra.mxu0 0.0
        %741 = vmatprep.subr.mxu0 0.0
        %742 = vmatpush1.msra.mxu0 0.0
        %743 = vmatprep.subr.mxu0 0.0
        %744 = vmatpush1.msra.mxu0 0.0
        %745 = vmatprep.subr.mxu0 0.0
        %746 = vmatpush1.msra.mxu0 0.0
        %747 = vmatprep.subr.mxu0 0.0
        %748 = vmatpush1.msra.mxu0 0.0
        %749 = vmatprep.subr.mxu0 0.0
        %750 = vmatpush1.msra.mxu0 0.0
        %751 = vmatprep.subr.mxu0 0.0
        %752 = vmatpush1.msra.mxu0 0.0
        %753 = vmatprep.subr.mxu0 0.0
        %754 = vmatpush1.msra.mxu0 0.0
        %755 = vmatprep.subr.mxu0 0.0
        %756 = vmatpush1.msra.mxu0 0.0
        %757 = vmatprep.subr.mxu0 0.0
        %758 = vmatpush1.msra.mxu0 0.0
        %759 = vmatprep.subr.mxu0 0.0
        %760 = vmatpush1.msra.mxu0 0.0
        %761 = vmatprep.subr.mxu0 0.0
        %762 = vmatpush1.msra.mxu0 0.0
        %763 = vmatprep.subr.mxu0 0.0
        %764 = vmatpush1.msra.mxu0 0.0
        %765 = vmatprep.subr.mxu0 0.0
        %766 = vmatpush1.msra.mxu0 0.0
        %767 = vmatprep.subr.mxu0 0.0
        %768 = vmatpush1.msra.mxu0 0.0
        %769 = vmatprep.mubr.f32.mxu0 0.0
        %v770 = vand.u32 %v289, 4294901760
        %771 = vmatmul.mubr.f32.gmra.mrb[0].mxu0 %v770
        %v772 = vpop.f32.mrb[0].mxu0
        %v773 = vadd.f32 %v698, %v772
        %v774 = vpop.f32.mrb[0].mxu0
        %775 = vdwg.mxu0
        %v776 = vmax.f32 %v773, 0.0
        %v777 = vld [vmem:[%s2] sm:$0x3]
        %vm778 = vcmask 15360
        %v780 = vsel %vm778, %v776, 0
        %vm782 = vcmask 1041408
        %v784 = vsel %vm782, %v777, 0
        %786 = vmatprep.subr.mxu0 0.0
        %v787 = vand.u32 %v784, 4294901760
        %788 = vmatpush1.msra.mxu0 %v787
        %789 = vmatprep.subr.mxu0 0.0
        %790 = vmatpush1.msra.mxu0 0.0
        %791 = vmatprep.subr.mxu0 0.0
        %792 = vmatpush1.msra.mxu0 0.0
        %793 = vmatprep.subr.mxu0 0.0
        %794 = vmatpush1.msra.mxu0 0.0
        %795 = vmatprep.subr.mxu0 0.0
        %796 = vmatpush1.msra.mxu0 0.0
        %797 = vmatprep.subr.mxu0 0.0
        %798 = vmatpush1.msra.mxu0 0.0
        %799 = vmatprep.subr.mxu0 0.0
        %800 = vmatpush1.msra.mxu0 0.0
        %801 = vmatprep.subr.mxu0 0.0
        %802 = vmatpush1.msra.mxu0 0.0
        %803 = vmatprep.subr.mxu0 0.0
        %804 = vmatpush1.msra.mxu0 0.0
        %805 = vmatprep.subr.mxu0 0.0
        %806 = vmatpush1.msra.mxu0 0.0
        %807 = vmatprep.subr.mxu0 0.0
        %808 = vmatpush1.msra.mxu0 0.0
        %809 = vmatprep.subr.mxu0 0.0
        %810 = vmatpush1.msra.mxu0 0.0
        %811 = vmatprep.subr.mxu0 0.0
        %812 = vmatpush1.msra.mxu0 0.0
        %813 = vmatprep.subr.mxu0 0.0
        %814 = vmatpush1.msra.mxu0 0.0
        %815 = vmatprep.subr.mxu0 0.0
        %816 = vmatpush1.msra.mxu0 0.0
        %817 = vmatprep.subr.mxu0 0.0
        %818 = vmatpush1.msra.mxu0 0.0
        %819 = vmatprep.subr.mxu0 0.0
        %820 = vmatpush1.msra.mxu0 0.0
        %821 = vmatprep.subr.mxu0 0.0
        %822 = vmatpush1.msra.mxu0 0.0
        %823 = vmatprep.subr.mxu0 0.0
        %824 = vmatpush1.msra.mxu0 0.0
        %825 = vmatprep.subr.mxu0 0.0
        %826 = vmatpush1.msra.mxu0 0.0
        %827 = vmatprep.subr.mxu0 0.0
        %828 = vmatpush1.msra.mxu0 0.0
        %829 = vmatprep.subr.mxu0 0.0
        %830 = vmatpush1.msra.mxu0 0.0
        %831 = vmatprep.subr.mxu0 0.0
        %832 = vmatpush1.msra.mxu0 0.0
        %833 = vmatprep.subr.mxu0 0.0
        %834 = vmatpush1.msra.mxu0 0.0
        %835 = vmatprep.subr.mxu0 0.0
        %836 = vmatpush1.msra.mxu0 0.0
        %837 = vmatprep.subr.mxu0 0.0
        %838 = vmatpush1.msra.mxu0 0.0
        %839 = vmatprep.subr.mxu0 0.0
        %840 = vmatpush1.msra.mxu0 0.0
        %841 = vmatprep.subr.mxu0 0.0
        %842 = vmatpush1.msra.mxu0 0.0
        %843 = vmatprep.subr.mxu0 0.0
        %844 = vmatpush1.msra.mxu0 0.0
        %845 = vmatprep.subr.mxu0 0.0
        %846 = vmatpush1.msra.mxu0 0.0
        %847 = vmatprep.subr.mxu0 0.0
        %848 = vmatpush1.msra.mxu0 0.0
        %849 = vmatprep.subr.mxu0 0.0
        %850 = vmatpush1.msra.mxu0 0.0
        %851 = vmatprep.mubr.f32.mxu0 0.0
        %v852 = vand.u32 %v780, 4294901760
        %v853 = vsub.f32 %v780, %v852
        %v854 = vand.u32 %v853, 4294901760
        %v855 = vsub.f32 %v853, %v854
        %v856 = vand.u32 %v855, 4294901760
        %857 = vmatmul.mubr.f32.gmra.mrb[0].mxu0 %v856
        %v858 = vpop.f32.mrb[0].mxu0
        %v859 = vadd.f32 0.0, %v858
        %v860 = vpop.f32.mrb[0].mxu0
        %861 = vdwg.mxu0
        %862 = vmatprep.subr.mxu0 0.0
        %v863 = vand.u32 %v784, 4294901760
        %v864 = vsub.f32 %v784, %v863
        %v865 = vand.u32 %v864, 4294901760
        %v866 = vsub.f32 %v864, %v865
        %v867 = vand.u32 %v866, 4294901760
        %868 = vmatpush1.msra.mxu0 %v867
        %869 = vmatprep.subr.mxu0 0.0
        %870 = vmatpush1.msra.mxu0 0.0
        %871 = vmatprep.subr.mxu0 0.0
        %872 = vmatpush1.msra.mxu0 0.0
        %873 = vmatprep.subr.mxu0 0.0
        %874 = vmatpush1.msra.mxu0 0.0
        %875 = vmatprep.subr.mxu0 0.0
        %876 = vmatpush1.msra.mxu0 0.0
        %877 = vmatprep.subr.mxu0 0.0
        %878 = vmatpush1.msra.mxu0 0.0
        %879 = vmatprep.subr.mxu0 0.0
        %880 = vmatpush1.msra.mxu0 0.0
        %881 = vmatprep.subr.mxu0 0.0
        %882 = vmatpush1.msra.mxu0 0.0
        %883 = vmatprep.subr.mxu0 0.0
        %884 = vmatpush1.msra.mxu0 0.0
        %885 = vmatprep.subr.mxu0 0.0
        %886 = vmatpush1.msra.mxu0 0.0
        %887 = vmatprep.subr.mxu0 0.0
        %888 = vmatpush1.msra.mxu0 0.0
        %889 = vmatprep.subr.mxu0 0.0
        %890 = vmatpush1.msra.mxu0 0.0
        %891 = vmatprep.subr.mxu0 0.0
        %892 = vmatpush1.msra.mxu0 0.0
        %893 = vmatprep.subr.mxu0 0.0
        %894 = vmatpush1.msra.mxu0 0.0
        %895 = vmatprep.subr.mxu0 0.0
        %896 = vmatpush1.msra.mxu0 0.0
        %897 = vmatprep.subr.mxu0 0.0
        %898 = vmatpush1.msra.mxu0 0.0
        %899 = vmatprep.subr.mxu0 0.0
        %900 = vmatpush1.msra.mxu0 0.0
        %901 = vmatprep.subr.mxu0 0.0
        %902 = vmatpush1.msra.mxu0 0.0
        %903 = vmatprep.subr.mxu0 0.0
        %904 = vmatpush1.msra.mxu0 0.0
        %905 = vmatprep.subr.mxu0 0.0
        %906 = vmatpush1.msra.mxu0 0.0
        %907 = vmatprep.subr.mxu0 0.0
        %908 = vmatpush1.msra.mxu0 0.0
        %909 = vmatprep.subr.mxu0 0.0
        %910 = vmatpush1.msra.mxu0 0.0
        %911 = vmatprep.subr.mxu0 0.0
        %912 = vmatpush1.msra.mxu0 0.0
        %913 = vmatprep.subr.mxu0 0.0
        %914 = vmatpush1.msra.mxu0 0.0
        %915 = vmatprep.subr.mxu0 0.0
        %916 = vmatpush1.msra.mxu0 0.0
        %917 = vmatprep.subr.mxu0 0.0
        %918 = vmatpush1.msra.mxu0 0.0
        %919 = vmatprep.subr.mxu0 0.0
        %920 = vmatpush1.msra.mxu0 0.0
        %921 = vmatprep.subr.mxu0 0.0
        %922 = vmatpush1.msra.mxu0 0.0
        %923 = vmatprep.subr.mxu0 0.0
        %924 = vmatpush1.msra.mxu0 0.0
        %925 = vmatprep.subr.mxu0 0.0
        %926 = vmatpush1.msra.mxu0 0.0
        %927 = vmatprep.subr.mxu0 0.0
        %928 = vmatpush1.msra.mxu0 0.0
        %929 = vmatprep.subr.mxu0 0.0
        %930 = vmatpush1.msra.mxu0 0.0
        %931 = vmatprep.mubr.f32.mxu0 0.0
        %v932 = vand.u32 %v780, 4294901760
        %933 = vmatmul.mubr.f32.gmra.mrb[0].mxu0 %v932
        %v934 = vpop.f32.mrb[0].mxu0
        %v935 = vadd.f32 %v859, %v934
        %v936 = vpop.f32.mrb[0].mxu0
        %937 = vdwg.mxu0
        %938 = vmatprep.subr.mxu0 0.0
        %v939 = vand.u32 %v784, 4294901760
        %v940 = vsub.f32 %v784, %v939
        %941 = vmatpush1.msra.mxu0 %v940
        %942 = vmatprep.subr.mxu0 0.0
        %943 = vmatpush1.msra.mxu0 0.0
        %944 = vmatprep.subr.mxu0 0.0
        %945 = vmatpush1.msra.mxu0 0.0
        %946 = vmatprep.subr.mxu0 0.0
        %947 = vmatpush1.msra.mxu0 0.0
        %948 = vmatprep.subr.mxu0 0.0
        %949 = vmatpush1.msra.mxu0 0.0
        %950 = vmatprep.subr.mxu0 0.0
        %951 = vmatpush1.msra.mxu0 0.0
        %952 = vmatprep.subr.mxu0 0.0
        %953 = vmatpush1.msra.mxu0 0.0
        %954 = vmatprep.subr.mxu0 0.0
        %955 = vmatpush1.msra.mxu0 0.0
        %956 = vmatprep.subr.mxu0 0.0
        %957 = vmatpush1.msra.mxu0 0.0
        %958 = vmatprep.subr.mxu0 0.0
        %959 = vmatpush1.msra.mxu0 0.0
        %960 = vmatprep.subr.mxu0 0.0
        %961 = vmatpush1.msra.mxu0 0.0
        %962 = vmatprep.subr.mxu0 0.0
        %963 = vmatpush1.msra.mxu0 0.0
        %964 = vmatprep.subr.mxu0 0.0
        %965 = vmatpush1.msra.mxu0 0.0
        %966 = vmatprep.subr.mxu0 0.0
        %967 = vmatpush1.msra.mxu0 0.0
        %968 = vmatprep.subr.mxu0 0.0
        %969 = vmatpush1.msra.mxu0 0.0
        %970 = vmatprep.subr.mxu0 0.0
        %971 = vmatpush1.msra.mxu0 0.0
        %972 = vmatprep.subr.mxu0 0.0
        %973 = vmatpush1.msra.mxu0 0.0
        %974 = vmatprep.subr.mxu0 0.0
        %975 = vmatpush1.msra.mxu0 0.0
        %976 = vmatprep.subr.mxu0 0.0
        %977 = vmatpush1.msra.mxu0 0.0
        %978 = vmatprep.subr.mxu0 0.0
        %979 = vmatpush1.msra.mxu0 0.0
        %980 = vmatprep.subr.mxu0 0.0
        %981 = vmatpush1.msra.mxu0 0.0
        %982 = vmatprep.subr.mxu0 0.0
        %983 = vmatpush1.msra.mxu0 0.0
        %984 = vmatprep.subr.mxu0 0.0
        %985 = vmatpush1.msra.mxu0 0.0
        %986 = vmatprep.subr.mxu0 0.0
        %987 = vmatpush1.msra.mxu0 0.0
        %988 = vmatprep.subr.mxu0 0.0
        %989 = vmatpush1.msra.mxu0 0.0
        %990 = vmatprep.subr.mxu0 0.0
        %991 = vmatpush1.msra.mxu0 0.0
        %992 = vmatprep.subr.mxu0 0.0
        %993 = vmatpush1.msra.mxu0 0.0
        %994 = vmatprep.subr.mxu0 0.0
        %995 = vmatpush1.msra.mxu0 0.0
        %996 = vmatprep.subr.mxu0 0.0
        %997 = vmatpush1.msra.mxu0 0.0
        %998 = vmatprep.subr.mxu0 0.0
        %999 = vmatpush1.msra.mxu0 0.0
        %1000 = vmatprep.subr.mxu0 0.0
        %1001 = vmatpush1.msra.mxu0 0.0
        %1002 = vmatprep.subr.mxu0 0.0
        %1003 = vmatpush1.msra.mxu0 0.0
        %1004 = vmatprep.mubr.f32.mxu0 0.0
        %v1005 = vand.u32 %v780, 4294901760
        %v1006 = vsub.f32 %v780, %v1005
        %1007 = vmatmul.mubr.f32.gmra.mrb[0].mxu0 %v1006
        %v1008 = vpop.f32.mrb[0].mxu0
        %v1009 = vadd.f32 %v935, %v1008
        %v1010 = vpop.f32.mrb[0].mxu0
        %1011 = vdwg.mxu0
        %1012 = vmatprep.subr.mxu0 0.0
        %v1013 = vand.u32 %v784, 4294901760
        %1014 = vmatpush1.msra.mxu0 %v1013
        %1015 = vmatprep.subr.mxu0 0.0
        %1016 = vmatpush1.msra.mxu0 0.0
        %1017 = vmatprep.subr.mxu0 0.0
        %1018 = vmatpush1.msra.mxu0 0.0
        %1019 = vmatprep.subr.mxu0 0.0
        %1020 = vmatpush1.msra.mxu0 0.0
        %1021 = vmatprep.subr.mxu0 0.0
        %1022 = vmatpush1.msra.mxu0 0.0
        %1023 = vmatprep.subr.mxu0 0.0
        %1024 = vmatpush1.msra.mxu0 0.0
        %1025 = vmatprep.subr.mxu0 0.0
        %1026 = vmatpush1.msra.mxu0 0.0
        %1027 = vmatprep.subr.mxu0 0.0
        %1028 = vmatpush1.msra.mxu0 0.0
        %1029 = vmatprep.subr.mxu0 0.0
        %1030 = vmatpush1.msra.mxu0 0.0
        %1031 = vmatprep.subr.mxu0 0.0
        %1032 = vmatpush1.msra.mxu0 0.0
        %1033 = vmatprep.subr.mxu0 0.0
        %1034 = vmatpush1.msra.mxu0 0.0
        %1035 = vmatprep.subr.mxu0 0.0
        %1036 = vmatpush1.msra.mxu0 0.0
        %1037 = vmatprep.subr.mxu0 0.0
        %1038 = vmatpush1.msra.mxu0 0.0
        %1039 = vmatprep.subr.mxu0 0.0
        %1040 = vmatpush1.msra.mxu0 0.0
        %1041 = vmatprep.subr.mxu0 0.0
        %1042 = vmatpush1.msra.mxu0 0.0
        %1043 = vmatprep.subr.mxu0 0.0
        %1044 = vmatpush1.msra.mxu0 0.0
        %1045 = vmatprep.subr.mxu0 0.0
        %1046 = vmatpush1.msra.mxu0 0.0
        %1047 = vmatprep.subr.mxu0 0.0
        %1048 = vmatpush1.msra.mxu0 0.0
        %1049 = vmatprep.subr.mxu0 0.0
        %1050 = vmatpush1.msra.mxu0 0.0
        %1051 = vmatprep.subr.mxu0 0.0
        %1052 = vmatpush1.msra.mxu0 0.0
        %1053 = vmatprep.subr.mxu0 0.0
        %1054 = vmatpush1.msra.mxu0 0.0
        %1055 = vmatprep.subr.mxu0 0.0
        %1056 = vmatpush1.msra.mxu0 0.0
        %1057 = vmatprep.subr.mxu0 0.0
        %1058 = vmatpush1.msra.mxu0 0.0
        %1059 = vmatprep.subr.mxu0 0.0
        %1060 = vmatpush1.msra.mxu0 0.0
        %1061 = vmatprep.subr.mxu0 0.0
        %1062 = vmatpush1.msra.mxu0 0.0
        %1063 = vmatprep.subr.mxu0 0.0
        %1064 = vmatpush1.msra.mxu0 0.0
        %1065 = vmatprep.subr.mxu0 0.0
        %1066 = vmatpush1.msra.mxu0 0.0
        %1067 = vmatprep.subr.mxu0 0.0
        %1068 = vmatpush1.msra.mxu0 0.0
        %1069 = vmatprep.subr.mxu0 0.0
        %1070 = vmatpush1.msra.mxu0 0.0
        %1071 = vmatprep.subr.mxu0 0.0
        %1072 = vmatpush1.msra.mxu0 0.0
        %1073 = vmatprep.subr.mxu0 0.0
        %1074 = vmatpush1.msra.mxu0 0.0
        %1075 = vmatprep.subr.mxu0 0.0
        %1076 = vmatpush1.msra.mxu0 0.0
        %1077 = vmatprep.mubr.f32.mxu0 0.0
        %v1078 = vand.u32 %v780, 4294901760
        %v1079 = vsub.f32 %v780, %v1078
        %v1080 = vand.u32 %v1079, 4294901760
        %1081 = vmatmul.mubr.f32.gmra.mrb[0].mxu0 %v1080
        %v1082 = vpop.f32.mrb[0].mxu0
        %v1083 = vadd.f32 %v1009, %v1082
        %v1084 = vpop.f32.mrb[0].mxu0
        %1085 = vdwg.mxu0
        %1086 = vmatprep.subr.mxu0 0.0
        %v1087 = vand.u32 %v784, 4294901760
        %v1088 = vsub.f32 %v784, %v1087
        %v1089 = vand.u32 %v1088, 4294901760
        %1090 = vmatpush1.msra.mxu0 %v1089
        %1091 = vmatprep.subr.mxu0 0.0
        %1092 = vmatpush1.msra.mxu0 0.0
        %1093 = vmatprep.subr.mxu0 0.0
        %1094 = vmatpush1.msra.mxu0 0.0
        %1095 = vmatprep.subr.mxu0 0.0
        %1096 = vmatpush1.msra.mxu0 0.0
        %1097 = vmatprep.subr.mxu0 0.0
        %1098 = vmatpush1.msra.mxu0 0.0
        %1099 = vmatprep.subr.mxu0 0.0
        %1100 = vmatpush1.msra.mxu0 0.0
        %1101 = vmatprep.subr.mxu0 0.0
        %1102 = vmatpush1.msra.mxu0 0.0
        %1103 = vmatprep.subr.mxu0 0.0
        %1104 = vmatpush1.msra.mxu0 0.0
        %1105 = vmatprep.subr.mxu0 0.0
        %1106 = vmatpush1.msra.mxu0 0.0
        %1107 = vmatprep.subr.mxu0 0.0
        %1108 = vmatpush1.msra.mxu0 0.0
        %1109 = vmatprep.subr.mxu0 0.0
        %1110 = vmatpush1.msra.mxu0 0.0
        %1111 = vmatprep.subr.mxu0 0.0
        %1112 = vmatpush1.msra.mxu0 0.0
        %1113 = vmatprep.subr.mxu0 0.0
        %1114 = vmatpush1.msra.mxu0 0.0
        %1115 = vmatprep.subr.mxu0 0.0
        %1116 = vmatpush1.msra.mxu0 0.0
        %1117 = vmatprep.subr.mxu0 0.0
        %1118 = vmatpush1.msra.mxu0 0.0
        %1119 = vmatprep.subr.mxu0 0.0
        %1120 = vmatpush1.msra.mxu0 0.0
        %1121 = vmatprep.subr.mxu0 0.0
        %1122 = vmatpush1.msra.mxu0 0.0
        %1123 = vmatprep.subr.mxu0 0.0
        %1124 = vmatpush1.msra.mxu0 0.0
        %1125 = vmatprep.subr.mxu0 0.0
        %1126 = vmatpush1.msra.mxu0 0.0
        %1127 = vmatprep.subr.mxu0 0.0
        %1128 = vmatpush1.msra.mxu0 0.0
        %1129 = vmatprep.subr.mxu0 0.0
        %1130 = vmatpush1.msra.mxu0 0.0
        %1131 = vmatprep.subr.mxu0 0.0
        %1132 = vmatpush1.msra.mxu0 0.0
        %1133 = vmatprep.subr.mxu0 0.0
        %1134 = vmatpush1.msra.mxu0 0.0
        %1135 = vmatprep.subr.mxu0 0.0
        %1136 = vmatpush1.msra.mxu0 0.0
        %1137 = vmatprep.subr.mxu0 0.0
        %1138 = vmatpush1.msra.mxu0 0.0
        %1139 = vmatprep.subr.mxu0 0.0
        %1140 = vmatpush1.msra.mxu0 0.0
        %1141 = vmatprep.subr.mxu0 0.0
        %1142 = vmatpush1.msra.mxu0 0.0
        %1143 = vmatprep.subr.mxu0 0.0
        %1144 = vmatpush1.msra.mxu0 0.0
        %1145 = vmatprep.subr.mxu0 0.0
        %1146 = vmatpush1.msra.mxu0 0.0
        %1147 = vmatprep.subr.mxu0 0.0
        %1148 = vmatpush1.msra.mxu0 0.0
        %1149 = vmatprep.subr.mxu0 0.0
        %1150 = vmatpush1.msra.mxu0 0.0
        %1151 = vmatprep.subr.mxu0 0.0
        %1152 = vmatpush1.msra.mxu0 0.0
        %1153 = vmatprep.mubr.f32.mxu0 0.0
        %v1154 = vand.u32 %v780, 4294901760
        %1155 = vmatmul.mubr.f32.gmra.mrb[0].mxu0 %v1154
        %v1156 = vpop.f32.mrb[0].mxu0
        %v1157 = vadd.f32 %v1083, %v1156
        %v1158 = vpop.f32.mrb[0].mxu0
        %1159 = vdwg.mxu0
        %1160 = vmatprep.subr.mxu0 0.0
        %v1161 = vand.u32 %v784, 4294901760
        %1162 = vmatpush1.msra.mxu0 %v1161
        %1163 = vmatprep.subr.mxu0 0.0
        %1164 = vmatpush1.msra.mxu0 0.0
        %1165 = vmatprep.subr.mxu0 0.0
        %1166 = vmatpush1.msra.mxu0 0.0
        %1167 = vmatprep.subr.mxu0 0.0
        %1168 = vmatpush1.msra.mxu0 0.0
        %1169 = vmatprep.subr.mxu0 0.0
        %1170 = vmatpush1.msra.mxu0 0.0
        %1171 = vmatprep.subr.mxu0 0.0
        %1172 = vmatpush1.msra.mxu0 0.0
        %1173 = vmatprep.subr.mxu0 0.0
        %1174 = vmatpush1.msra.mxu0 0.0
        %1175 = vmatprep.subr.mxu0 0.0
        %1176 = vmatpush1.msra.mxu0 0.0
        %1177 = vmatprep.subr.mxu0 0.0
        %1178 = vmatpush1.msra.mxu0 0.0
        %1179 = vmatprep.subr.mxu0 0.0
        %1180 = vmatpush1.msra.mxu0 0.0
        %1181 = vmatprep.subr.mxu0 0.0
        %1182 = vmatpush1.msra.mxu0 0.0
        %1183 = vmatprep.subr.mxu0 0.0
        %1184 = vmatpush1.msra.mxu0 0.0
        %1185 = vmatprep.subr.mxu0 0.0
        %1186 = vmatpush1.msra.mxu0 0.0
        %1187 = vmatprep.subr.mxu0 0.0
        %1188 = vmatpush1.msra.mxu0 0.0
        %1189 = vmatprep.subr.mxu0 0.0
        %1190 = vmatpush1.msra.mxu0 0.0
        %1191 = vmatprep.subr.mxu0 0.0
        %1192 = vmatpush1.msra.mxu0 0.0
        %1193 = vmatprep.subr.mxu0 0.0
        %1194 = vmatpush1.msra.mxu0 0.0
        %1195 = vmatprep.subr.mxu0 0.0
        %1196 = vmatpush1.msra.mxu0 0.0
        %1197 = vmatprep.subr.mxu0 0.0
        %1198 = vmatpush1.msra.mxu0 0.0
        %1199 = vmatprep.subr.mxu0 0.0
        %1200 = vmatpush1.msra.mxu0 0.0
        %1201 = vmatprep.subr.mxu0 0.0
        %1202 = vmatpush1.msra.mxu0 0.0
        %1203 = vmatprep.subr.mxu0 0.0
        %1204 = vmatpush1.msra.mxu0 0.0
        %1205 = vmatprep.subr.mxu0 0.0
        %1206 = vmatpush1.msra.mxu0 0.0
        %1207 = vmatprep.subr.mxu0 0.0
        %1208 = vmatpush1.msra.mxu0 0.0
        %1209 = vmatprep.subr.mxu0 0.0
        %1210 = vmatpush1.msra.mxu0 0.0
        %1211 = vmatprep.subr.mxu0 0.0
        %1212 = vmatpush1.msra.mxu0 0.0
        %1213 = vmatprep.subr.mxu0 0.0
        %1214 = vmatpush1.msra.mxu0 0.0
        %1215 = vmatprep.subr.mxu0 0.0
        %1216 = vmatpush1.msra.mxu0 0.0
        %1217 = vmatprep.subr.mxu0 0.0
        %1218 = vmatpush1.msra.mxu0 0.0
        %1219 = vmatprep.subr.mxu0 0.0
        %1220 = vmatpush1.msra.mxu0 0.0
        %1221 = vmatprep.subr.mxu0 0.0
        %1222 = vmatpush1.msra.mxu0 0.0
        %1223 = vmatprep.subr.mxu0 0.0
        %1224 = vmatpush1.msra.mxu0 0.0
        %1225 = vmatprep.mubr.f32.mxu0 0.0
        %v1226 = vand.u32 %v780, 4294901760
        %1227 = vmatmul.mubr.f32.gmra.mrb[0].mxu0 %v1226
        %v1228 = vpop.f32.mrb[0].mxu0
        %v1229 = vadd.f32 %v1157, %v1228
        %v1230 = vpop.f32.mrb[0].mxu0
        %1231 = vdwg.mxu0
        %v1233 = vrot.slane %v1229, 1
        %v1235 = vadd.f32 %v1229, %v1233
        %v1236 = vand.u32 2147483647, %v1235
        %v1237 = vsub.f32 0.0, %v1236
        %v1238 = vmul.f32 %v1237, 1.442695
        %v1239 = vpow.pop %v1238
        %v1240 = vadd.f32 %v1239, 1.0
        %v1241 = vrcp.pop %v1240
        %v1242 = vmul.f32 1.0, %v1241
        %vm1243 = vcmp.ge.f32.partialorder %v1235, 0.0
        %v1244 = vsub.f32 1.0, %v1242
        %v1245 = vsel %vm1243, %v1242, %v1244
        %v1246 = vlaneseq
        %v1247 = vshrl.u32 %v1246, 7
        %v1248 = vsub.s32 0, %v1247
        %v1249 = vrot.slane %v1245, %v1248
        %1251 = vbcast.lane.b32.xlu0 %v1249, 256
        %v1252 = vpop.permute.xlu0 %1251
        %s1254 = sor.u32 256, 8
        %1255 = vbcast.lane.b32.xlu0 %v1249, %s1254
        %v1256 = vpop.permute.xlu0 %1255
        %s1258 = sor.u32 256, 16
        %1259 = vbcast.lane.b32.xlu0 %v1249, %s1258
        %v1260 = vpop.permute.xlu0 %1259
        %s1262 = sor.u32 256, 24
        %1263 = vbcast.lane.b32.xlu0 %v1249, %s1262
        %v1264 = vpop.permute.xlu0 %1263
        %v1265 = vmul.f32 %v189, %v1252
        %v1266 = vmul.f32 %v190, %v1252
        %v1267 = vmul.f32 %v191, %v1256
        %v1268 = vmul.f32 %v192, %v1256
        %v1269 = vmul.f32 %v193, %v1260
        %v1270 = vmul.f32 %v194, %v1260
        %v1271 = vmul.f32 %v195, %v1264
        %v1272 = vmul.f32 %v196, %v1264
        %1273 = vst [vmem:[%s188] sm:$0xff] %v1265
        %1274 = vst [vmem:[%s188 + $0x8] sm:$0xff] %v1266
        %1275 = vst [vmem:[%s188 + $0x10] sm:$0xff] %v1267
        %1276 = vst [vmem:[%s188 + $0x18] sm:$0xff] %v1268
        %1277 = vst [vmem:[%s188 + $0x20] sm:$0xff] %v1269
        %1278 = vst [vmem:[%s188 + $0x28] sm:$0xff] %v1270
        %1279 = vst [vmem:[%s188 + $0x30] sm:$0xff] %v1271
        %1280 = vst [vmem:[%s188 + $0x38] sm:$0xff] %v1272
        %s1281 = sand.u32 %s96, 1
        %s1282 = scalar_lea.sflag [#allocation4], %s1281
        %s1283 = sand.u32 %s96, 1
        %s1284 = smul.addr %s1283, 64
        %s1285 = scalar_lea.vmem [#allocation5], %s1284
        // Predicated region
        $region37: #{tpu_custom_call.1} parent=31 // pred_check
          %p1286 = pneg %p106
        $region38: #{tpu_custom_call.1} parent=31 // pred_check_branch
          %1288 = sbr.rel (%p1286) target = $region40
        $region39: #{tpu_custom_call.1} parent=31 // pred_region
          %s1290 = ssub.s32 1024, 1024
          %1291 = vsyncadd %s1282, %s1290
          %s1292 = smul.addr %s20, 8
          %s1293 = smul.addr %s1292, 128
          %s1294 = scalar_lea.hbm %s3, %s1293
          %s1295 = sshll.u32 %s1285, 4
          %s1296 = int_to_ptr.vmem [resolvable:$true] %s1295
          %1301 = dma.vmem_to_hbm [thread:$0]  %s1296, 1024, %s1294, %s1282, 256, 256, 16
        $region40: #{tpu_custom_call.1} parent=31 // pred_fallthru
          _
      $region32: #{tpu_custom_call.1} parent=5 // pred_fallthru
        _
      %p1302 = scmp.le.s32.totalorder 2, %s15
      // Predicated region
      $region41: #{tpu_custom_call.1} parent=5 // pred_check
        %p1303 = pneg %p1302
      $region42: #{tpu_custom_call.1} parent=5 // pred_check_branch
        %1305 = sbr.rel (%p1303) target = $region44
      $region43: #{tpu_custom_call.1} parent=5 // pred_region
        %s1306 = ssub.s32 %s15, 2
        // Predicated region
        $region45: #{tpu_custom_call.1} parent=43 // pred_check
          %p1307 = pneg %p112
        $region46: #{tpu_custom_call.1} parent=43 // pred_check_branch
          %1309 = sbr.rel (%p1307) target = $region48
        $region47: #{tpu_custom_call.1} parent=43 // pred_region
          %s1310 = sand.u32 %s97, 1
          %s1311 = scalar_lea.sflag [#allocation4], %s1310
          %s1312 = sand.u32 %s97, 1
          %s1313 = smul.addr %s1312, 64
          %s1314 = scalar_lea.vmem [#allocation5], %s1313
          %1315 = dma.done %s1311, 1024
        $region48: #{tpu_custom_call.1} parent=43 // pred_fallthru
          _
      $region44: #{tpu_custom_call.1} parent=5 // pred_fallthru
        _
    $region6: #{tpu_custom_call.1} parent=1 // loop_footer
      %s19 = sadd.s32 1, %s15
    $region7: #{tpu_custom_call.1} parent=1 // loop_footer_branch
      %14 = sbr.rel target = $region3
    $region8: #{tpu_custom_call.1} parent=1 // loop_exit
      _
    %1316 = vsyncpa [#allocation3], 1
    %s1317 = scalar_lea.sflag [#allocation3], 1
    %1318 = vsyncpa %s1317, 1
    %1319 = vsyncpa [#allocation4], 1
    %s1320 = scalar_lea.sflag [#allocation4], 1
    %1321 = vsyncpa %s1320, 1

</llo_original>
